<compile_context>
chip_gen: v6e
topology: v6e:2x2x1
jax: 0.10.0
libtpu: 0.0.40
codegen_flags: <defaults>
</compile_context>

<pallas_src>
import functools

import jax
import jax.numpy as jnp
from jax.experimental import pallas as pl
from jax.experimental.pallas import tpu as pltpu


def prop1_kernel(adj_t_ref, x_t_ref, w_ref, b_ref, o_ref, *, K, prop_dtype):
    """One grid step handles G batch elements.

    adj_t_ref: (G, N, N)  -- adj^T per batch, already in `prop_dtype`
    x_t_ref:   (G, C, N)  -- x^T per batch (N on the lane axis)
    w_ref:     (C, 1)     -- proj weight column (f32, VMEM)
    b_ref:     (1, 1)     -- proj bias (SMEM scalar)
    o_ref:     (G, C, N)
    """
    adj_t = adj_t_ref[...]
    if adj_t.dtype != prop_dtype:
        adj_t = adj_t.astype(prop_dtype)
    w_col = w_ref[...].astype(jnp.float32)          # (C, 1)
    b = b_ref[0, 0]                                 # scalar f32 from SMEM

    xk = x_t_ref[...].astype(jnp.float32)           # pred_0^T, (G, C, N)
    acc = jnp.zeros_like(xk)                        # sum_k s_k * pred_k^T

    # K is a small static constant -> unrolled Python loop (visible to LLO).
    for k in range(K + 1):
        # Retain score for hop k: sigmoid(w . pred_k + b), one scalar per node.
        # VPU multiply + sublane reduce (axis=1) -> keeps the MXU free for adj.
        raw = jnp.sum(xk * w_col[None, :, :], axis=1, keepdims=True)  # (G, 1, N)
        score = jax.nn.sigmoid(raw + b)                               # (G, 1, N)
        acc = acc + score * xk
        if k < K:
            # pred_{k+1}^T = pred_k^T @ adj^T  (== (adj @ pred_k)^T)
            # bf16 MXU matmul, f32 accumulation.
            xk = jnp.einsum(
                "gcn,gnm->gcm",
                xk.astype(prop_dtype),
                adj_t,
                preferred_element_type=jnp.float32,
            )

    o_ref[...] = acc.astype(o_ref.dtype)


def prop1_forward(x, adj, weight, bias, K, *,
                  propagation_dtype=jnp.bfloat16,
                  vmem_budget_bytes=40 * 1024 * 1024):
    """x: [B,N,C], adj: [B,N,N], weight: [1,C] (Linear.weight), bias: [1].

    Returns [B,N,C].
    """
    B, N, C = x.shape
    assert adj.shape == (B, N, N)

    # Lane-dense layout plumbing (cheap XLA transposes outside the kernel).
    x_t = jnp.swapaxes(x, -1, -2)                                # (B, C, N)
    adj_t = jnp.swapaxes(adj, -1, -2).astype(propagation_dtype)  # (B, N, N) = adj^T
    w_col = jnp.reshape(weight, (C, 1)).astype(jnp.float32)      # (C, 1)
    b_sc = jnp.reshape(bias, (1, 1)).astype(jnp.float32)         # (1, 1) -> SMEM

    # Batch elements per grid step, sized against a conservative VMEM budget
    # (fits v7x's 64 MiB physical VMEM; v5e's 16 MiB default scoped limit is
    # overridden explicitly below).
    adj_bytes = N * N * jnp.dtype(propagation_dtype).itemsize
    io_bytes = C * N * 4 + C * N * jnp.dtype(x.dtype).itemsize
    per_batch = 2 * (adj_bytes + io_bytes) + 6 * C * N * 4  # dbl-buffered IO + temps
    G = 1
    for g in range(B, 0, -1):
        if B % g == 0 and g * per_batch <= vmem_budget_bytes:
            G = g
            break
    grid = (B // G,)
    # TODO(synk): for B == 1 on v7x (2 TensorCores) add a second parallel grid
    # axis over N-row tiles of adj so both cores get work; for very large N,
    # tile adj rows instead of using a monolithic (G, N, N) block.

    vmem_limit = int(min(100 * 1024 * 1024,
                         max(8 * 1024 * 1024, 2 * G * per_batch)))

    kernel = functools.partial(prop1_kernel, K=K, prop_dtype=propagation_dtype)
    cost = pl.CostEstimate(
        flops=int(2 * B * K * C * N * N + 4 * B * (K + 1) * C * N),
        transcendentals=int(B * (K + 1) * N),
        bytes_accessed=int(B * (adj_bytes + io_bytes)),
    )

    out_t = pl.pallas_call(
        kernel,
        out_shape=jax.ShapeDtypeStruct((B, C, N), x.dtype),
        grid_spec=pltpu.PrefetchScalarGridSpec(
            num_scalar_prefetch=0,
            grid=grid,
            in_specs=[
                pl.BlockSpec((G, N, N), lambda i: (i, 0, 0)),       # adj^T tile
                pl.BlockSpec((G, C, N), lambda i: (i, 0, 0)),       # x^T tile
                pl.BlockSpec((C, 1), lambda i: (0, 0)),             # proj weight col
                pl.BlockSpec(memory_space=pltpu.MemorySpace.SMEM),  # proj bias
            ],
            out_specs=pl.BlockSpec((G, C, N), lambda i: (i, 0, 0)),
        ),
        compiler_params=pltpu.CompilerParams(
            dimension_semantics=("parallel",),
            vmem_limit_bytes=vmem_limit,
        ),
        cost_estimate=cost,
    )(adj_t, x_t, w_col, b_sc)

    return jnp.swapaxes(out_t, -1, -2)                               # (B, N, C)


def prop1_reference(x, adj, weight, bias, K):
    """Pure-JAX f32 reference mirroring the PyTorch forward."""
    preds = [x]
    xk = x
    for _ in range(K):
        xk = jnp.matmul(adj, xk)
        preds.append(xk)
    pps = jnp.stack(preds, axis=2)                               # [B, N, K+1, C]
    retain = jnp.squeeze(pps @ weight.T + bias, -1)              # [B, N, K+1]
    retain = jax.nn.sigmoid(retain)[:, :, None, :]               # [B, N, 1, K+1]
    out = jnp.squeeze(jnp.matmul(retain, pps), 2)                # [B, N, C]
    return out


if __name__ == "__main__":
    # Small shapes consistent with the module's forward:
    # batch=2, nodes=128, num_classes=8, K=3 hops.
    B, N, C, K = 2, 128, 8, 3

    key = jax.random.PRNGKey(0)
    kx, ka, kw, kb = jax.random.split(key, 4)

    x = jax.random.normal(kx, (B, N, C), dtype=jnp.float32)
    # Row-normalized random adjacency so propagation stays well-scaled.
    adj_raw = jax.random.uniform(ka, (B, N, N), dtype=jnp.float32)
    adj = adj_raw / jnp.sum(adj_raw, axis=-1, keepdims=True)

    # Deterministic Linear(num_classes, 1) parameters (PyTorch-style uniform init).
    bound = 1.0 / jnp.sqrt(jnp.float32(C))
    weight = jax.random.uniform(kw, (1, C), jnp.float32, -bound, bound)  # Linear.weight
    bias = jax.random.uniform(kb, (1,), jnp.float32, -bound, bound)      # Linear.bias

    out = prop1_forward(x, adj, weight, bias, K)
    out = jax.block_until_ready(out)

    ref = prop1_reference(x, adj, weight, bias, K)
    assert out.shape == (B, N, C)
    # Propagation matmuls run in bf16 (f32 accumulation) -> looser tolerance
    # than an all-f32 comparison.
    assert jnp.allclose(out, ref, atol=5e-2, rtol=5e-2), "mismatch vs reference"

    print("KERNEL_OK")
</pallas_src>

<mosaic_0001>
module attributes {stable_mosaic.version = 11 : i64} {
  func.func @prop1_kernel(%arg0: i32, %arg1: memref<2x128x128xbf16, #tpu.memory_space<vmem>>, %arg2: memref<2x8x128xf32, #tpu.memory_space<vmem>>, %arg3: memref<8x1xf32, #tpu.memory_space<vmem>>, %arg4: memref<1x1xf32, #tpu.memory_space<smem>>, %arg5: memref<2x8x128xf32, #tpu.memory_space<vmem>>) attributes {dimension_semantics = [#tpu.dimension_semantics<parallel>], iteration_bounds = array<i64: 1>, scalar_prefetch = 0 : i64, scratch_operands = 0 : i64, tpu.core_type = #tpu.core_type<tc>, window_params = [{transform_indices = @transform_0, window_bounds = array<i64: 2, 128, 128>}, {transform_indices = @transform_1, window_bounds = array<i64: 2, 8, 128>}, {pipeline_mode = #tpu.pipeline_mode<synchronous>, transform_indices = @transform_2, window_bounds = array<i64: 8, 1>}, {transform_indices = @transform_3, window_bounds = array<i64: 1, 1>}, {transform_indices = @transform_4, window_bounds = array<i64: 2, 8, 128>}]} {
    %c0 = arith.constant 0 : index
    %c0_0 = arith.constant 0 : index
    %c0_1 = arith.constant 0 : index
    %0 = vector.load %arg1[%c0, %c0_0, %c0_1] : memref<2x128x128xbf16, #tpu.memory_space<vmem>>, vector<2x128x128xbf16>
    %c0_2 = arith.constant 0 : index
    %c0_3 = arith.constant 0 : index
    %1 = vector.load %arg3[%c0_2, %c0_3] : memref<8x1xf32, #tpu.memory_space<vmem>>, vector<8x1xf32>
    %c0_4 = arith.constant 0 : index
    %c0_5 = arith.constant 0 : index
    %2 = memref.load %arg4[%c0_4, %c0_5] : memref<1x1xf32, #tpu.memory_space<smem>>
    %c0_6 = arith.constant 0 : index
    %c0_7 = arith.constant 0 : index
    %c0_8 = arith.constant 0 : index
    %3 = vector.load %arg2[%c0_6, %c0_7, %c0_8] : memref<2x8x128xf32, #tpu.memory_space<vmem>>, vector<2x8x128xf32>
    %cst = arith.constant 0.000000e+00 : f32
    %4 = vector.broadcast %cst : f32 to vector<2x8x128xf32>
    %5 = vector.shape_cast %1 : vector<8x1xf32> to vector<1x8x1xf32>
    %6 = vector.broadcast %5 : vector<1x8x1xf32> to vector<2x8x128xf32>
    %7 = arith.mulf %3, %6 : vector<2x8x128xf32>
    %cst_9 = arith.constant dense<0.000000e+00> : vector<2x128xf32>
    %8 = vector.multi_reduction <add>, %7, %cst_9 [1] : vector<2x8x128xf32> to vector<2x128xf32>
    %9 = vector.shape_cast %8 : vector<2x128xf32> to vector<2x1x128xf32>
    %10 = vector.broadcast %2 : f32 to vector<2x1x128xf32>
    %11 = arith.addf %9, %10 : vector<2x1x128xf32>
    %12 = arith.negf %11 : vector<2x1x128xf32>
    %13 = math.exp %12 : vector<2x1x128xf32>
    %cst_10 = arith.constant 1.000000e+00 : f32
    %14 = vector.broadcast %cst_10 : f32 to vector<2x1x128xf32>
    %15 = arith.addf %14, %13 : vector<2x1x128xf32>
    %16 = arith.divf %14, %15 : vector<2x1x128xf32>
    %17 = vector.broadcast %16 : vector<2x1x128xf32> to vector<2x8x128xf32>
    %18 = arith.mulf %17, %3 : vector<2x8x128xf32>
    %19 = arith.addf %4, %18 : vector<2x8x128xf32>
    %20 = arith.truncf %3 : vector<2x8x128xf32> to vector<2x8x128xbf16>
    "tpu.trace_start"() <{level = 10 : i32, message = "gcn,gnm->gcm"}> : () -> ()
    %cst_11 = arith.constant dense<0.000000e+00> : vector<2x8x128xf32>
    %21 = tpu.matmul %20, %0, %cst_11 {dimension_numbers = #tpu.dot_dimension_numbers<[2], [1], [1], [2], [0, 0, 0, 1, 1, 2], [0], [0]>} : vector<2x8x128xbf16>, vector<2x128x128xbf16>, vector<2x8x128xf32> -> vector<2x8x128xf32>
    "tpu.trace_stop"() : () -> ()
    %22 = vector.shape_cast %1 : vector<8x1xf32> to vector<1x8x1xf32>
    %23 = vector.broadcast %22 : vector<1x8x1xf32> to vector<2x8x128xf32>
    %24 = arith.mulf %21, %23 : vector<2x8x128xf32>
    %cst_12 = arith.constant dense<0.000000e+00> : vector<2x128xf32>
    %25 = vector.multi_reduction <add>, %24, %cst_12 [1] : vector<2x8x128xf32> to vector<2x128xf32>
    %26 = vector.shape_cast %25 : vector<2x128xf32> to vector<2x1x128xf32>
    %27 = vector.broadcast %2 : f32 to vector<2x1x128xf32>
    %28 = arith.addf %26, %27 : vector<2x1x128xf32>
    %29 = arith.negf %28 : vector<2x1x128xf32>
    %30 = math.exp %29 : vector<2x1x128xf32>
    %cst_13 = arith.constant 1.000000e+00 : f32
    %31 = vector.broadcast %cst_13 : f32 to vector<2x1x128xf32>
    %32 = arith.addf %31, %30 : vector<2x1x128xf32>
    %33 = arith.divf %31, %32 : vector<2x1x128xf32>
    %34 = vector.broadcast %33 : vector<2x1x128xf32> to vector<2x8x128xf32>
    %35 = arith.mulf %34, %21 : vector<2x8x128xf32>
    %36 = arith.addf %19, %35 : vector<2x8x128xf32>
    %37 = arith.truncf %21 : vector<2x8x128xf32> to vector<2x8x128xbf16>
    "tpu.trace_start"() <{level = 10 : i32, message = "gcn,gnm->gcm"}> : () -> ()
    %cst_14 = arith.constant dense<0.000000e+00> : vector<2x8x128xf32>
    %38 = tpu.matmul %37, %0, %cst_14 {dimension_numbers = #tpu.dot_dimension_numbers<[2], [1], [1], [2], [0, 0, 0, 1, 1, 2], [0], [0]>} : vector<2x8x128xbf16>, vector<2x128x128xbf16>, vector<2x8x128xf32> -> vector<2x8x128xf32>
    "tpu.trace_stop"() : () -> ()
    %39 = vector.shape_cast %1 : vector<8x1xf32> to vector<1x8x1xf32>
    %40 = vector.broadcast %39 : vector<1x8x1xf32> to vector<2x8x128xf32>
    %41 = arith.mulf %38, %40 : vector<2x8x128xf32>
    %cst_15 = arith.constant dense<0.000000e+00> : vector<2x128xf32>
    %42 = vector.multi_reduction <add>, %41, %cst_15 [1] : vector<2x8x128xf32> to vector<2x128xf32>
    %43 = vector.shape_cast %42 : vector<2x128xf32> to vector<2x1x128xf32>
    %44 = vector.broadcast %2 : f32 to vector<2x1x128xf32>
    %45 = arith.addf %43, %44 : vector<2x1x128xf32>
    %46 = arith.negf %45 : vector<2x1x128xf32>
    %47 = math.exp %46 : vector<2x1x128xf32>
    %cst_16 = arith.constant 1.000000e+00 : f32
    %48 = vector.broadcast %cst_16 : f32 to vector<2x1x128xf32>
    %49 = arith.addf %48, %47 : vector<2x1x128xf32>
    %50 = arith.divf %48, %49 : vector<2x1x128xf32>
    %51 = vector.broadcast %50 : vector<2x1x128xf32> to vector<2x8x128xf32>
    %52 = arith.mulf %51, %38 : vector<2x8x128xf32>
    %53 = arith.addf %36, %52 : vector<2x8x128xf32>
    %54 = arith.truncf %38 : vector<2x8x128xf32> to vector<2x8x128xbf16>
    "tpu.trace_start"() <{level = 10 : i32, message = "gcn,gnm->gcm"}> : () -> ()
    %cst_17 = arith.constant dense<0.000000e+00> : vector<2x8x128xf32>
    %55 = tpu.matmul %54, %0, %cst_17 {dimension_numbers = #tpu.dot_dimension_numbers<[2], [1], [1], [2], [0, 0, 0, 1, 1, 2], [0], [0]>} : vector<2x8x128xbf16>, vector<2x128x128xbf16>, vector<2x8x128xf32> -> vector<2x8x128xf32>
    "tpu.trace_stop"() : () -> ()
    %56 = vector.shape_cast %1 : vector<8x1xf32> to vector<1x8x1xf32>
    %57 = vector.broadcast %56 : vector<1x8x1xf32> to vector<2x8x128xf32>
    %58 = arith.mulf %55, %57 : vector<2x8x128xf32>
    %cst_18 = arith.constant dense<0.000000e+00> : vector<2x128xf32>
    %59 = vector.multi_reduction <add>, %58, %cst_18 [1] : vector<2x8x128xf32> to vector<2x128xf32>
    %60 = vector.shape_cast %59 : vector<2x128xf32> to vector<2x1x128xf32>
    %61 = vector.broadcast %2 : f32 to vector<2x1x128xf32>
    %62 = arith.addf %60, %61 : vector<2x1x128xf32>
    %63 = arith.negf %62 : vector<2x1x128xf32>
    %64 = math.exp %63 : vector<2x1x128xf32>
    %cst_19 = arith.constant 1.000000e+00 : f32
    %65 = vector.broadcast %cst_19 : f32 to vector<2x1x128xf32>
    %66 = arith.addf %65, %64 : vector<2x1x128xf32>
    %67 = arith.divf %65, %66 : vector<2x1x128xf32>
    %68 = vector.broadcast %67 : vector<2x1x128xf32> to vector<2x8x128xf32>
    %69 = arith.mulf %68, %55 : vector<2x8x128xf32>
    %70 = arith.addf %53, %69 : vector<2x8x128xf32>
    %c0_20 = arith.constant 0 : index
    %c0_21 = arith.constant 0 : index
    %c0_22 = arith.constant 0 : index
    %71 = vector.load %arg5[%c0_20, %c0_21, %c0_22] : memref<2x8x128xf32, #tpu.memory_space<vmem>>, vector<2x8x128xf32>
    tpu.vector_store %arg5[%c0_20, %c0_21, %c0_22], %70 {strides = array<i32>} : memref<2x8x128xf32, #tpu.memory_space<vmem>>, vector<2x8x128xf32>,
    return
  }
  func.func @transform_0(%arg0: i32) -> (i32, i32, i32) {
    %c0_i32 = arith.constant 0 : i32
    %c0_i32_0 = arith.constant 0 : i32
    %c0_i32_1 = arith.constant 0 : i32
    return %arg0, %c0_i32, %c0_i32_0 : i32, i32, i32
  }
  func.func @transform_1(%arg0: i32) -> (i32, i32, i32) {
    %c0_i32 = arith.constant 0 : i32
    %c0_i32_0 = arith.constant 0 : i32
    %c0_i32_1 = arith.constant 0 : i32
    return %arg0, %c0_i32, %c0_i32_0 : i32, i32, i32
  }
  func.func @transform_2(%arg0: i32) -> (i32, i32) {
    %c0_i32 = arith.constant 0 : i32
    %c0_i32_0 = arith.constant 0 : i32
    %c0_i32_1 = arith.constant 0 : i32
    return %c0_i32, %c0_i32_0 : i32, i32
  }
  func.func @transform_3(%arg0: i32) -> (i32, i32) {
    %c0_i32 = arith.constant 0 : i32
    %c0_i32_0 = arith.constant 0 : i32
    %c0_i32_1 = arith.constant 0 : i32
    return %c0_i32, %c0_i32_0 : i32, i32
  }
  func.func @transform_4(%arg0: i32) -> (i32, i32, i32) {
    %c0_i32 = arith.constant 0 : i32
    %c0_i32_0 = arith.constant 0 : i32
    %c0_i32_1 = arith.constant 0 : i32
    return %arg0, %c0_i32, %c0_i32_0 : i32, i32, i32
  }
}

</mosaic_0001>

<llo_original>
// kernel: tpu_custom_call.1
$region0: #{tpu_custom_call.1}
  #allocation0 [shape = 'u32[]', space=smem, size = 0x4, offset = 0x4, fixed_abs, tag = 'smem constant byte address 0x4 - core index']
  #allocation1 [shape = 'u32[144,128]{1,0:T(1,128)}', space=vmem, size = 0x12000, scoped, tag = 'internal scratch']
  #allocation2 [shape = 'f32[1,1]{1,0:T(1,128)S(6)}', space=smem, size = 0x200, scoped, tag = 'scoped memory for tpu_custom_call.1']
  %s0 = inlined_call_operand.hbm [shape: bf16[2,128,128], index: 0, kind: input, shape index: {}]
  %s1 = inlined_call_operand.hbm [shape: f32[2,8,128], index: 1, kind: input, shape index: {}]
  %s2 = inlined_call_operand.vmem [shape: f32[8,1], index: 2, kind: input, shape index: {}]
  %s3 = inlined_call_operand.<no memory space> [shape: f32[1,1], index: 3, kind: input, shape index: {}]
  %s4 = inlined_call_operand.hbm [shape: f32[2,8,128], index: 4, kind: output, shape index: {}]
  %s5 = sld [smem:[#allocation0]]
  $region34: #{tpu_custom_call.1} parent=0
    _
  %s7 = ssub.s32 1, %s5
  %s8 = scalar_select 0, %s7, %s5
  %9 = sst [smem:[#allocation2]] %s3
  $region1: #{tpu_custom_call.1} parent=0
    #allocation3 [shape = 'u8[65536]{0}', space=vmem, size = 0x10000, scoped, tag = 'input window, operand 0, single buffered']
    #allocation4 [shape = 's32[1]{0}', space=sflag, size = 0x4, scoped, tag = 'scoped memory for tpu_custom_call.1']
    #allocation5 [shape = 's32[1]{0}', space=sflag, size = 0x4, scoped, tag = 'scoped memory for tpu_custom_call.1']
    #allocation6 [shape = 'u8[8192]{0}', space=vmem, size = 0x2000, scoped, tag = 'input window, operand 1, single buffered']
    #allocation7 [shape = 's32[1]{0}', space=sflag, size = 0x4, scoped, tag = 'scoped memory for tpu_custom_call.1']
    #allocation8 [shape = 'u8[8192]{0}', space=vmem, size = 0x2000, scoped, tag = 'output window, operand 0, single buffered']
    %10 = vsyncpa [#allocation4], 0
    %11 = vsyncpa [#allocation7], 0
    %12 = vsyncpa [#allocation5], 0
    // Predicated region
    $region2: #{tpu_custom_call.1} parent=1 // pred_check
      _
    $region3: #{tpu_custom_call.1} parent=1 // pred_check_branch
      %14 = sbr.rel (0) target = $region5
    $region4: #{tpu_custom_call.1} parent=1 // pred_region
      %s16 = ssub.s32 2048, 2048
      %17 = vsyncadd [#allocation4], %s16
      %s18 = sshll.u32 [#allocation3], 4
      %s19 = int_to_ptr.vmem [resolvable:$true] %s18
      %24 = dma.hbm_to_vmem [thread:$0]  %s0, 2048, %s19, [#allocation4], 64, 64, 4
    $region5: #{tpu_custom_call.1} parent=1 // pred_fallthru
      _
    // Predicated region
    $region6: #{tpu_custom_call.1} parent=1 // pred_check
      _
    $region7: #{tpu_custom_call.1} parent=1 // pred_check_branch
      %26 = sbr.rel (0) target = $region9
    $region8: #{tpu_custom_call.1} parent=1 // pred_region
      %s28 = ssub.s32 256, 256
      %29 = vsyncadd [#allocation7], %s28
      %s30 = sshll.u32 [#allocation6], 4
      %s31 = int_to_ptr.vmem [resolvable:$true] %s30
      %36 = dma.hbm_to_vmem [thread:$0]  %s1, 256, %s31, [#allocation7], 128, 128, 8
    $region9: #{tpu_custom_call.1} parent=1 // pred_fallthru
      _
    // Predicated region
    $region10: #{tpu_custom_call.1} parent=1 // pred_check
      _
    $region11: #{tpu_custom_call.1} parent=1 // pred_check_branch
      %38 = sbr.rel (0) target = $region13
    $region12: #{tpu_custom_call.1} parent=1 // pred_region
      _
    $region13: #{tpu_custom_call.1} parent=1 // pred_fallthru
      _
    // Predicated region
    $region14: #{tpu_custom_call.1} parent=1 // pred_check
      _
    $region15: #{tpu_custom_call.1} parent=1 // pred_check_branch
      %40 = sbr.rel (0) target = $region17
    $region16: #{tpu_custom_call.1} parent=1 // pred_region
      _
    $region17: #{tpu_custom_call.1} parent=1 // pred_fallthru
      _
    // Predicated region
    $region18: #{tpu_custom_call.1} parent=1 // pred_check
      _
    $region19: #{tpu_custom_call.1} parent=1 // pred_check_branch
      %42 = sbr.rel (0) target = $region21
    $region20: #{tpu_custom_call.1} parent=1 // pred_region
      %43 = dma.done [#allocation4], 2048
    $region21: #{tpu_custom_call.1} parent=1 // pred_fallthru
      _
    // Predicated region
    $region22: #{tpu_custom_call.1} parent=1 // pred_check
      _
    $region23: #{tpu_custom_call.1} parent=1 // pred_check_branch
      %45 = sbr.rel (0) target = $region25
    $region24: #{tpu_custom_call.1} parent=1 // pred_region
      %46 = dma.done [#allocation7], 256
    $region25: #{tpu_custom_call.1} parent=1 // pred_fallthru
      _
    %v48 = vld [vmem:[#allocation3] sm:$0xf]
    %v49 = vld [vmem:[#allocation3 + $0x4] sm:$0xf]
    %v50 = vld [vmem:[#allocation3 + $0x8] sm:$0xf]
    %v51 = vld [vmem:[#allocation3 + $0xc] sm:$0xf]
    %v52 = vld [vmem:[#allocation3 + $0x10] sm:$0xf]
    %v53 = vld [vmem:[#allocation3 + $0x14] sm:$0xf]
    %v54 = vld [vmem:[#allocation3 + $0x18] sm:$0xf]
    %v55 = vld [vmem:[#allocation3 + $0x1c] sm:$0xf]
    %v56 = vld [vmem:[#allocation3 + $0x20] sm:$0xf]
    %v57 = vld [vmem:[#allocation3 + $0x24] sm:$0xf]
    %v58 = vld [vmem:[#allocation3 + $0x28] sm:$0xf]
    %v59 = vld [vmem:[#allocation3 + $0x2c] sm:$0xf]
    %v60 = vld [vmem:[#allocation3 + $0x30] sm:$0xf]
    %v61 = vld [vmem:[#allocation3 + $0x34] sm:$0xf]
    %v62 = vld [vmem:[#allocation3 + $0x38] sm:$0xf]
    %v63 = vld [vmem:[#allocation3 + $0x3c] sm:$0xf]
    %v64 = vld [vmem:[#allocation3 + $0x40] sm:$0xf]
    %v65 = vld [vmem:[#allocation3 + $0x44] sm:$0xf]
    %v66 = vld [vmem:[#allocation3 + $0x48] sm:$0xf]
    %v67 = vld [vmem:[#allocation3 + $0x4c] sm:$0xf]
    %v68 = vld [vmem:[#allocation3 + $0x50] sm:$0xf]
    %v69 = vld [vmem:[#allocation3 + $0x54] sm:$0xf]
    %v70 = vld [vmem:[#allocation3 + $0x58] sm:$0xf]
    %v71 = vld [vmem:[#allocation3 + $0x5c] sm:$0xf]
    %v72 = vld [vmem:[#allocation3 + $0x60] sm:$0xf]
    %v73 = vld [vmem:[#allocation3 + $0x64] sm:$0xf]
    %v74 = vld [vmem:[#allocation3 + $0x68] sm:$0xf]
    %v75 = vld [vmem:[#allocation3 + $0x6c] sm:$0xf]
    %v76 = vld [vmem:[#allocation3 + $0x70] sm:$0xf]
    %v77 = vld [vmem:[#allocation3 + $0x74] sm:$0xf]
    %v78 = vld [vmem:[#allocation3 + $0x78] sm:$0xf]
    %v79 = vld [vmem:[#allocation3 + $0x7c] sm:$0xf]
    %v80 = vld [vmem:[%s2] sm:$0xff]
    %s81 = sld [smem:[#allocation2]]
    %v82 = vld [vmem:[#allocation6] sm:$0xff]
    %v83 = vld [vmem:[#allocation6 + $0x8] sm:$0xff]
    %85 = vset.pattern.permute.xlu0 0
    %86 = vperm.xlu0 %85, %v80
    %v87 = vpop.permute.xlu0 %86
    %v89 = vmul.f32 %v82, %v87
    %v90 = vmul.f32 %v83, %v87
    %v91 = vrot.slane %v89, 4
    %v92 = vadd.f32 %v89, %v91
    %v93 = vrot.slane %v92, 2
    %v94 = vadd.f32 %v92, %v93
    %v95 = vrot.slane %v94, 1
    %v96 = vadd.f32 %v94, %v95
    %v97 = vrot.slane %v90, 4
    %v98 = vadd.f32 %v90, %v97
    %v99 = vrot.slane %v98, 2
    %v100 = vadd.f32 %v98, %v99
    %v101 = vrot.slane %v100, 1
    %v102 = vadd.f32 %v100, %v101
    %v103 = vstv %s81
    %v104 = vadd.f32 %v96, %v103
    %v105 = vadd.f32 %v102, %v103
    %v106 = vxor.u32 %v104, 2147483648
    %v107 = vxor.u32 %v105, 2147483648
    %v108 = vmul.f32 %v106, 1.442695
    %v109 = vpow.pop %v108
    %v110 = vmul.f32 %v107, 1.442695
    %v111 = vpow.pop %v110
    %v112 = vadd.f32 %v109, 1.0
    %v113 = vadd.f32 %v111, 1.0
    %v114 = vrcp.pop %v112
    %v115 = vmul.f32 1.0, %v114
    %v116 = vrcp.pop %v113
    %v117 = vmul.f32 1.0, %v116
    %v118 = vmul.f32 %v115, %v82
    %v119 = vmul.f32 %v117, %v83
    %v120 = vadd.f32 %v118, 0.0
    %v121 = vadd.f32 %v119, 0.0
    %v122 = vpack.c.bf16 %v82, %v82
    %v123 = vpack.c.bf16 %v83, %v83
    %v140 = vunpack.c.l.b16 %v48
    %v141 = vunpack.c.l.b16 %v49
    %v142 = vunpack.c.l.b16 %v50
    %v143 = vunpack.c.l.b16 %v51
    %v144 = vunpack.c.l.b16 %v52
    %v145 = vunpack.c.l.b16 %v53
    %v146 = vunpack.c.l.b16 %v54
    %v147 = vunpack.c.l.b16 %v55
    %v148 = vunpack.c.l.b16 %v56
    %v149 = vunpack.c.l.b16 %v57
    %v150 = vunpack.c.l.b16 %v58
    %v151 = vunpack.c.l.b16 %v59
    %v152 = vunpack.c.l.b16 %v60
    %v153 = vunpack.c.l.b16 %v61
    %v154 = vunpack.c.l.b16 %v62
    %v155 = vunpack.c.l.b16 %v63
    %v156 = vpack.c.b16 %v141, %v140
    %v157 = vpack.c.b16 %v143, %v142
    %v158 = vpack.c.b16 %v145, %v144
    %v159 = vpack.c.b16 %v147, %v146
    %v160 = vpack.c.b16 %v149, %v148
    %v161 = vpack.c.b16 %v151, %v150
    %v162 = vpack.c.b16 %v153, %v152
    %v163 = vpack.c.b16 %v155, %v154
    %172 = vmatprep.subr.bf16.mxu0 0
    %173 = vmatpush1.bf16.msra.mxu0 %v163
    %174 = vmatprep.subr.bf16.mxu0 0
    %175 = vmatpush1.bf16.msra.mxu0 %v162
    %176 = vmatprep.subr.bf16.mxu0 0
    %177 = vmatpush1.bf16.msra.mxu0 %v161
    %178 = vmatprep.subr.bf16.mxu0 0
    %179 = vmatpush1.bf16.msra.mxu0 %v160
    %180 = vmatprep.subr.bf16.mxu0 0
    %181 = vmatpush1.bf16.msra.mxu0 %v159
    %182 = vmatprep.subr.bf16.mxu0 0
    %183 = vmatpush1.bf16.msra.mxu0 %v158
    %184 = vmatprep.subr.bf16.mxu0 0
    %185 = vmatpush1.bf16.msra.mxu0 %v157
    %186 = vmatprep.subr.bf16.mxu0 0
    %187 = vmatpush1.bf16.msra.mxu0 %v156
    %188 = vmatprep.subr.bf16.mxu0 0
    %189 = vmatpush2.bf16.msra.mxu0 0
    %190 = vmatprep.subr.bf16.mxu0 0
    %191 = vmatpush2.bf16.msra.mxu0 0
    %192 = vmatprep.subr.bf16.mxu0 0
    %193 = vmatpush2.bf16.msra.mxu0 0
    %194 = vmatprep.subr.bf16.mxu0 0
    %195 = vmatpush2.bf16.msra.mxu0 0
    %196 = vmatprep.subr.bf16.mxu0 0
    %197 = vmatpush2.bf16.msra.mxu0 0
    %198 = vmatprep.subr.bf16.mxu0 0
    %199 = vmatpush2.bf16.msra.mxu0 0
    %200 = vmatprep.subr.bf16.mxu0 0
    %201 = vmatpush2.bf16.msra.mxu0 0
    %202 = vmatprep.subr.bf16.mxu0 0
    %203 = vmatpush2.bf16.msra.mxu0 0
    %204 = vmatprep.mubr.bf16.mxu0 0
    %205 = vmatmul.mubr.bf16.gmra.mxu0 %v122
    %v206 = vpop.f32.mrf.mxu0
    %v207 = vadd.f32 0.0, %v206
    %v208 = vpop.f32.mrf.mxu0
    %v209 = vpop.f32.mrf.mxu0
    %v210 = vpop.f32.mrf.mxu0
    %211 = vdwg.mxu0
    %v228 = vunpack.c.l.b16 %v64
    %v229 = vunpack.c.l.b16 %v65
    %v230 = vunpack.c.l.b16 %v66
    %v231 = vunpack.c.l.b16 %v67
    %v232 = vunpack.c.l.b16 %v68
    %v233 = vunpack.c.l.b16 %v69
    %v234 = vunpack.c.l.b16 %v70
    %v235 = vunpack.c.l.b16 %v71
    %v236 = vunpack.c.l.b16 %v72
    %v237 = vunpack.c.l.b16 %v73
    %v238 = vunpack.c.l.b16 %v74
    %v239 = vunpack.c.l.b16 %v75
    %v240 = vunpack.c.l.b16 %v76
    %v241 = vunpack.c.l.b16 %v77
    %v242 = vunpack.c.l.b16 %v78
    %v243 = vunpack.c.l.b16 %v79
    %v244 = vpack.c.b16 %v229, %v228
    %v245 = vpack.c.b16 %v231, %v230
    %v246 = vpack.c.b16 %v233, %v232
    %v247 = vpack.c.b16 %v235, %v234
    %v248 = vpack.c.b16 %v237, %v236
    %v249 = vpack.c.b16 %v239, %v238
    %v250 = vpack.c.b16 %v241, %v240
    %v251 = vpack.c.b16 %v243, %v242
    %260 = vmatprep.subr.bf16.mxu0 0
    %261 = vmatpush1.bf16.msra.mxu0 %v251
    %262 = vmatprep.subr.bf16.mxu0 0
    %263 = vmatpush1.bf16.msra.mxu0 %v250
    %264 = vmatprep.subr.bf16.mxu0 0
    %265 = vmatpush1.bf16.msra.mxu0 %v249
    %266 = vmatprep.subr.bf16.mxu0 0
    %267 = vmatpush1.bf16.msra.mxu0 %v248
    %268 = vmatprep.subr.bf16.mxu0 0
    %269 = vmatpush1.bf16.msra.mxu0 %v247
    %270 = vmatprep.subr.bf16.mxu0 0
    %271 = vmatpush1.bf16.msra.mxu0 %v246
    %272 = vmatprep.subr.bf16.mxu0 0
    %273 = vmatpush1.bf16.msra.mxu0 %v245
    %274 = vmatprep.subr.bf16.mxu0 0
    %275 = vmatpush1.bf16.msra.mxu0 %v244
    %276 = vmatprep.subr.bf16.mxu0 0
    %277 = vmatpush2.bf16.msra.mxu0 0
    %278 = vmatprep.subr.bf16.mxu0 0
    %279 = vmatpush2.bf16.msra.mxu0 0
    %280 = vmatprep.subr.bf16.mxu0 0
    %281 = vmatpush2.bf16.msra.mxu0 0
    %282 = vmatprep.subr.bf16.mxu0 0
    %283 = vmatpush2.bf16.msra.mxu0 0
    %284 = vmatprep.subr.bf16.mxu0 0
    %285 = vmatpush2.bf16.msra.mxu0 0
    %286 = vmatprep.subr.bf16.mxu0 0
    %287 = vmatpush2.bf16.msra.mxu0 0
    %288 = vmatprep.subr.bf16.mxu0 0
    %289 = vmatpush2.bf16.msra.mxu0 0
    %290 = vmatprep.subr.bf16.mxu0 0
    %291 = vmatpush2.bf16.msra.mxu0 0
    %292 = vmatprep.mubr.bf16.mxu0 0
    %293 = vmatmul.mubr.bf16.gmra.mxu0 %v123
    %v294 = vpop.f32.mrf.mxu0
    %v295 = vadd.f32 0.0, %v294
    %v296 = vpop.f32.mrf.mxu0
    %v297 = vpop.f32.mrf.mxu0
    %v298 = vpop.f32.mrf.mxu0
    %299 = vdwg.mxu0
    %v300 = vmul.f32 %v207, %v87
    %v301 = vmul.f32 %v295, %v87
    %v302 = vrot.slane %v300, 4
    %v303 = vadd.f32 %v300, %v302
    %v304 = vrot.slane %v303, 2
    %v305 = vadd.f32 %v303, %v304
    %v306 = vrot.slane %v305, 1
    %v307 = vadd.f32 %v305, %v306
    %v308 = vrot.slane %v301, 4
    %v309 = vadd.f32 %v301, %v308
    %v310 = vrot.slane %v309, 2
    %v311 = vadd.f32 %v309, %v310
    %v312 = vrot.slane %v311, 1
    %v313 = vadd.f32 %v311, %v312
    %v314 = vadd.f32 %v307, %v103
    %v315 = vadd.f32 %v313, %v103
    %v316 = vxor.u32 %v314, 2147483648
    %v317 = vxor.u32 %v315, 2147483648
    %v318 = vmul.f32 %v316, 1.442695
    %v319 = vpow.pop %v318
    %v320 = vmul.f32 %v317, 1.442695
    %v321 = vpow.pop %v320
    %v322 = vadd.f32 %v319, 1.0
    %v323 = vadd.f32 %v321, 1.0
    %v324 = vrcp.pop %v322
    %v325 = vmul.f32 1.0, %v324
    %v326 = vrcp.pop %v323
    %v327 = vmul.f32 1.0, %v326
    %v328 = vmul.f32 %v325, %v207
    %v329 = vmul.f32 %v327, %v295
    %v330 = vadd.f32 %v120, %v328
    %v331 = vadd.f32 %v121, %v329
    %v332 = vpack.c.bf16 %v207, %v207
    %v333 = vpack.c.bf16 %v295, %v295
    %334 = vmatprep.subr.bf16.mxu0 0
    %335 = vmatpush1.bf16.msra.mxu0 %v163
    %336 = vmatprep.subr.bf16.mxu0 0
    %337 = vmatpush1.bf16.msra.mxu0 %v162
    %338 = vmatprep.subr.bf16.mxu0 0
    %339 = vmatpush1.bf16.msra.mxu0 %v161
    %340 = vmatprep.subr.bf16.mxu0 0
    %341 = vmatpush1.bf16.msra.mxu0 %v160
    %342 = vmatprep.subr.bf16.mxu0 0
    %343 = vmatpush1.bf16.msra.mxu0 %v159
    %344 = vmatprep.subr.bf16.mxu0 0
    %345 = vmatpush1.bf16.msra.mxu0 %v158
    %346 = vmatprep.subr.bf16.mxu0 0
    %347 = vmatpush1.bf16.msra.mxu0 %v157
    %348 = vmatprep.subr.bf16.mxu0 0
    %349 = vmatpush1.bf16.msra.mxu0 %v156
    %350 = vmatprep.subr.bf16.mxu0 0
    %351 = vmatpush2.bf16.msra.mxu0 0
    %352 = vmatprep.subr.bf16.mxu0 0
    %353 = vmatpush2.bf16.msra.mxu0 0
    %354 = vmatprep.subr.bf16.mxu0 0
    %355 = vmatpush2.bf16.msra.mxu0 0
    %356 = vmatprep.subr.bf16.mxu0 0
    %357 = vmatpush2.bf16.msra.mxu0 0
    %358 = vmatprep.subr.bf16.mxu0 0
    %359 = vmatpush2.bf16.msra.mxu0 0
    %360 = vmatprep.subr.bf16.mxu0 0
    %361 = vmatpush2.bf16.msra.mxu0 0
    %362 = vmatprep.subr.bf16.mxu0 0
    %363 = vmatpush2.bf16.msra.mxu0 0
    %364 = vmatprep.subr.bf16.mxu0 0
    %365 = vmatpush2.bf16.msra.mxu0 0
    %366 = vmatprep.mubr.bf16.mxu0 0
    %367 = vmatmul.mubr.bf16.gmra.mxu0 %v332
    %v368 = vpop.f32.mrf.mxu0
    %v369 = vadd.f32 0.0, %v368
    %v370 = vpop.f32.mrf.mxu0
    %v371 = vpop.f32.mrf.mxu0
    %v372 = vpop.f32.mrf.mxu0
    %373 = vdwg.mxu0
    %374 = vmatprep.subr.bf16.mxu0 0
    %375 = vmatpush1.bf16.msra.mxu0 %v251
    %376 = vmatprep.subr.bf16.mxu0 0
    %377 = vmatpush1.bf16.msra.mxu0 %v250
    %378 = vmatprep.subr.bf16.mxu0 0
    %379 = vmatpush1.bf16.msra.mxu0 %v249
    %380 = vmatprep.subr.bf16.mxu0 0
    %381 = vmatpush1.bf16.msra.mxu0 %v248
    %382 = vmatprep.subr.bf16.mxu0 0
    %383 = vmatpush1.bf16.msra.mxu0 %v247
    %384 = vmatprep.subr.bf16.mxu0 0
    %385 = vmatpush1.bf16.msra.mxu0 %v246
    %386 = vmatprep.subr.bf16.mxu0 0
    %387 = vmatpush1.bf16.msra.mxu0 %v245
    %388 = vmatprep.subr.bf16.mxu0 0
    %389 = vmatpush1.bf16.msra.mxu0 %v244
    %390 = vmatprep.subr.bf16.mxu0 0
    %391 = vmatpush2.bf16.msra.mxu0 0
    %392 = vmatprep.subr.bf16.mxu0 0
    %393 = vmatpush2.bf16.msra.mxu0 0
    %394 = vmatprep.subr.bf16.mxu0 0
    %395 = vmatpush2.bf16.msra.mxu0 0
    %396 = vmatprep.subr.bf16.mxu0 0
    %397 = vmatpush2.bf16.msra.mxu0 0
    %398 = vmatprep.subr.bf16.mxu0 0
    %399 = vmatpush2.bf16.msra.mxu0 0
    %400 = vmatprep.subr.bf16.mxu0 0
    %401 = vmatpush2.bf16.msra.mxu0 0
    %402 = vmatprep.subr.bf16.mxu0 0
    %403 = vmatpush2.bf16.msra.mxu0 0
    %404 = vmatprep.subr.bf16.mxu0 0
    %405 = vmatpush2.bf16.msra.mxu0 0
    %406 = vmatprep.mubr.bf16.mxu0 0
    %407 = vmatmul.mubr.bf16.gmra.mxu0 %v333
    %v408 = vpop.f32.mrf.mxu0
    %v409 = vadd.f32 0.0, %v408
    %v410 = vpop.f32.mrf.mxu0
    %v411 = vpop.f32.mrf.mxu0
    %v412 = vpop.f32.mrf.mxu0
    %413 = vdwg.mxu0
    %v414 = vmul.f32 %v369, %v87
    %v415 = vmul.f32 %v409, %v87
    %v416 = vrot.slane %v414, 4
    %v417 = vadd.f32 %v414, %v416
    %v418 = vrot.slane %v417, 2
    %v419 = vadd.f32 %v417, %v418
    %v420 = vrot.slane %v419, 1
    %v421 = vadd.f32 %v419, %v420
    %v422 = vrot.slane %v415, 4
    %v423 = vadd.f32 %v415, %v422
    %v424 = vrot.slane %v423, 2
    %v425 = vadd.f32 %v423, %v424
    %v426 = vrot.slane %v425, 1
    %v427 = vadd.f32 %v425, %v426
    %v428 = vadd.f32 %v421, %v103
    %v429 = vadd.f32 %v427, %v103
    %v430 = vxor.u32 %v428, 2147483648
    %v431 = vxor.u32 %v429, 2147483648
    %v432 = vmul.f32 %v430, 1.442695
    %v433 = vpow.pop %v432
    %v434 = vmul.f32 %v431, 1.442695
    %v435 = vpow.pop %v434
    %v436 = vadd.f32 %v433, 1.0
    %v437 = vadd.f32 %v435, 1.0
    %v438 = vrcp.pop %v436
    %v439 = vmul.f32 1.0, %v438
    %v440 = vrcp.pop %v437
    %v441 = vmul.f32 1.0, %v440
    %v442 = vmul.f32 %v439, %v369
    %v443 = vmul.f32 %v441, %v409
    %v444 = vadd.f32 %v330, %v442
    %v445 = vadd.f32 %v331, %v443
    %v446 = vpack.c.bf16 %v369, %v369
    %v447 = vpack.c.bf16 %v409, %v409
    %448 = vmatprep.subr.bf16.mxu0 0
    %449 = vmatpush1.bf16.msra.mxu0 %v163
    %450 = vmatprep.subr.bf16.mxu0 0
    %451 = vmatpush1.bf16.msra.mxu0 %v162
    %452 = vmatprep.subr.bf16.mxu0 0
    %453 = vmatpush1.bf16.msra.mxu0 %v161
    %454 = vmatprep.subr.bf16.mxu0 0
    %455 = vmatpush1.bf16.msra.mxu0 %v160
    %456 = vmatprep.subr.bf16.mxu0 0
    %457 = vmatpush1.bf16.msra.mxu0 %v159
    %458 = vmatprep.subr.bf16.mxu0 0
    %459 = vmatpush1.bf16.msra.mxu0 %v158
    %460 = vmatprep.subr.bf16.mxu0 0
    %461 = vmatpush1.bf16.msra.mxu0 %v157
    %462 = vmatprep.subr.bf16.mxu0 0
    %463 = vmatpush1.bf16.msra.mxu0 %v156
    %464 = vmatprep.subr.bf16.mxu0 0
    %465 = vmatpush2.bf16.msra.mxu0 0
    %466 = vmatprep.subr.bf16.mxu0 0
    %467 = vmatpush2.bf16.msra.mxu0 0
    %468 = vmatprep.subr.bf16.mxu0 0
    %469 = vmatpush2.bf16.msra.mxu0 0
    %470 = vmatprep.subr.bf16.mxu0 0
    %471 = vmatpush2.bf16.msra.mxu0 0
    %472 = vmatprep.subr.bf16.mxu0 0
    %473 = vmatpush2.bf16.msra.mxu0 0
    %474 = vmatprep.subr.bf16.mxu0 0
    %475 = vmatpush2.bf16.msra.mxu0 0
    %476 = vmatprep.subr.bf16.mxu0 0
    %477 = vmatpush2.bf16.msra.mxu0 0
    %478 = vmatprep.subr.bf16.mxu0 0
    %479 = vmatpush2.bf16.msra.mxu0 0
    %480 = vmatprep.mubr.bf16.mxu0 0
    %481 = vmatmul.mubr.bf16.gmra.mxu0 %v446
    %v482 = vpop.f32.mrf.mxu0
    %v483 = vadd.f32 0.0, %v482
    %v484 = vpop.f32.mrf.mxu0
    %v485 = vpop.f32.mrf.mxu0
    %v486 = vpop.f32.mrf.mxu0
    %487 = vdwg.mxu0
    %488 = vmatprep.subr.bf16.mxu0 0
    %489 = vmatpush1.bf16.msra.mxu0 %v251
    %490 = vmatprep.subr.bf16.mxu0 0
    %491 = vmatpush1.bf16.msra.mxu0 %v250
    %492 = vmatprep.subr.bf16.mxu0 0
    %493 = vmatpush1.bf16.msra.mxu0 %v249
    %494 = vmatprep.subr.bf16.mxu0 0
    %495 = vmatpush1.bf16.msra.mxu0 %v248
    %496 = vmatprep.subr.bf16.mxu0 0
    %497 = vmatpush1.bf16.msra.mxu0 %v247
    %498 = vmatprep.subr.bf16.mxu0 0
    %499 = vmatpush1.bf16.msra.mxu0 %v246
    %500 = vmatprep.subr.bf16.mxu0 0
    %501 = vmatpush1.bf16.msra.mxu0 %v245
    %502 = vmatprep.subr.bf16.mxu0 0
    %503 = vmatpush1.bf16.msra.mxu0 %v244
    %504 = vmatprep.subr.bf16.mxu0 0
    %505 = vmatpush2.bf16.msra.mxu0 0
    %506 = vmatprep.subr.bf16.mxu0 0
    %507 = vmatpush2.bf16.msra.mxu0 0
    %508 = vmatprep.subr.bf16.mxu0 0
    %509 = vmatpush2.bf16.msra.mxu0 0
    %510 = vmatprep.subr.bf16.mxu0 0
    %511 = vmatpush2.bf16.msra.mxu0 0
    %512 = vmatprep.subr.bf16.mxu0 0
    %513 = vmatpush2.bf16.msra.mxu0 0
    %514 = vmatprep.subr.bf16.mxu0 0
    %515 = vmatpush2.bf16.msra.mxu0 0
    %516 = vmatprep.subr.bf16.mxu0 0
    %517 = vmatpush2.bf16.msra.mxu0 0
    %518 = vmatprep.subr.bf16.mxu0 0
    %519 = vmatpush2.bf16.msra.mxu0 0
    %520 = vmatprep.mubr.bf16.mxu0 0
    %521 = vmatmul.mubr.bf16.gmra.mxu0 %v447
    %v522 = vpop.f32.mrf.mxu0
    %v523 = vadd.f32 0.0, %v522
    %v524 = vpop.f32.mrf.mxu0
    %v525 = vpop.f32.mrf.mxu0
    %v526 = vpop.f32.mrf.mxu0
    %527 = vdwg.mxu0
    %v528 = vmul.f32 %v483, %v87
    %v529 = vmul.f32 %v523, %v87
    %v530 = vrot.slane %v528, 4
    %v531 = vadd.f32 %v528, %v530
    %v532 = vrot.slane %v531, 2
    %v533 = vadd.f32 %v531, %v532
    %v534 = vrot.slane %v533, 1
    %v535 = vadd.f32 %v533, %v534
    %v536 = vrot.slane %v529, 4
    %v537 = vadd.f32 %v529, %v536
    %v538 = vrot.slane %v537, 2
    %v539 = vadd.f32 %v537, %v538
    %v540 = vrot.slane %v539, 1
    %v541 = vadd.f32 %v539, %v540
    %v542 = vadd.f32 %v535, %v103
    %v543 = vadd.f32 %v541, %v103
    %v544 = vxor.u32 %v542, 2147483648
    %v545 = vxor.u32 %v543, 2147483648
    %v546 = vmul.f32 %v544, 1.442695
    %v547 = vpow.pop %v546
    %v548 = vmul.f32 %v545, 1.442695
    %v549 = vpow.pop %v548
    %v550 = vadd.f32 %v547, 1.0
    %v551 = vadd.f32 %v549, 1.0
    %v552 = vrcp.pop %v550
    %v553 = vmul.f32 1.0, %v552
    %v554 = vrcp.pop %v551
    %v555 = vmul.f32 1.0, %v554
    %v556 = vmul.f32 %v553, %v483
    %v557 = vmul.f32 %v555, %v523
    %v558 = vadd.f32 %v444, %v556
    %v559 = vadd.f32 %v445, %v557
    %560 = vst [vmem:[#allocation8] sm:$0xff] %v558
    %561 = vst [vmem:[#allocation8 + $0x8] sm:$0xff] %v559
    // Predicated region
    $region26: #{tpu_custom_call.1} parent=1 // pred_check
      _
    $region27: #{tpu_custom_call.1} parent=1 // pred_check_branch
      %563 = sbr.rel (0) target = $region29
    $region28: #{tpu_custom_call.1} parent=1 // pred_region
      %s565 = ssub.s32 256, 256
      %566 = vsyncadd [#allocation5], %s565
      %s567 = sshll.u32 [#allocation8], 4
      %s568 = int_to_ptr.vmem [resolvable:$true] %s567
      %573 = dma.vmem_to_hbm [thread:$0]  %s568, 256, %s4, [#allocation5], 128, 128, 8
    $region29: #{tpu_custom_call.1} parent=1 // pred_fallthru
      _
    // Predicated region
    $region30: #{tpu_custom_call.1} parent=1 // pred_check
      _
    $region31: #{tpu_custom_call.1} parent=1 // pred_check_branch
      %575 = sbr.rel (0) target = $region33
    $region32: #{tpu_custom_call.1} parent=1 // pred_region
      %576 = dma.done [#allocation5], 256
    $region33: #{tpu_custom_call.1} parent=1 // pred_fallthru
      _
    %577 = vsyncpa [#allocation4], 1
    %578 = vsyncpa [#allocation7], 1
    %579 = vsyncpa [#allocation5], 1

</llo_original>
